<compile_context>
chip_gen: v7x
topology: tpu7x:2x2x1
jax: 0.10.0
libtpu: 0.0.40
codegen_flags: <defaults>
</compile_context>

<pallas_src>
import jax
import jax.numpy as jnp
from jax.experimental import pallas as pl
from jax.experimental.pallas import tpu as pltpu

# DukeNet's neginf(torch.float32) == -1e20.  Python float -> jaxpr literal inside the kernel.
NEG_INF = -1e20


def _score_kernel(ctx2_ref, sk_ref,
                  wxy_ref, ws_ref, bck_ref,
                  wk_ref, bk_ref,
                  pool_ref, mask_ref,
                  score_ref):
    """Masked knowledge-tracking scores for one batch block.

    ctx2  : [bn, 2H]   [context_x_use | context_y_use] (contiguous reshape of ctx_use)
    sk    : [bn, H]    shifted_knowledge_use
    wxy   : [2H, H]    project_c_k weight block acting on ctx2, stored [in, out] (bf16)
    ws    : [H, H]     project_c_k weight block acting on sk, stored [in, out]   (bf16)
    bck   : [1, H]     project_c_k bias
    wk    : [H, H]     project_k weight in PyTorch [out, in] layout (right-multiply)
    bk    : [1, H]     project_k bias
    pool  : [bn, K, H] knowledge_tracking_pool_encoded[1]
    mask  : [bn, Kp]   tracking_ck_mask padded to lane width (int32, 1 = keep)
    score : [bn, Kp]   output (lane-dense; wrapper slices [:, :K])
    """
    f32 = jnp.float32

    # project_c_k(cat([cx, cy, sk], dim=1)) == ctx2 @ Wxy + sk @ Ws + b.
    # Operands stay in their native (bf16) dtype -> native MXU path; f32 accumulation.
    con_pro = (jnp.dot(ctx2_ref[...], wxy_ref[...], preferred_element_type=f32)
               + jnp.dot(sk_ref[...], ws_ref[...], preferred_element_type=f32)
               + bck_ref[...].astype(f32))                                      # [bn, H] f32

    # Refactored project_k:  score = <pool, con_pro @ W_k> + <con_pro, b_k>
    v = jnp.dot(con_pro.astype(wk_ref.dtype), wk_ref[...],
                preferred_element_type=f32)                                     # [bn, H] f32
    bias = jnp.sum(con_pro * bk_ref[...].astype(f32), axis=-1, keepdims=True)   # [bn, 1] f32

    # Pool contraction: multiply in the pool's (bf16) dtype, accumulate lane reduce in f32.
    prod = pool_ref[...] * v.astype(pool_ref.dtype)[:, None, :]                 # [bn, K, H]
    s = jnp.sum(prod, axis=-1, dtype=f32)                                       # [bn, K] f32

    # Lane-pad the K scores to the dense Kp output width (replaces the selector matmul).
    pad = score_ref.shape[-1] - s.shape[-1]
    if pad:
        s = jnp.concatenate([s, jnp.zeros((s.shape[0], pad), s.dtype)], axis=-1)
    s = s + bias                                                                # [bn, Kp]

    # masked_fill_(~tracking_ck_mask, neginf); padded lanes have mask == 0 -> NEG_INF too.
    score_ref[...] = jnp.where(mask_ref[...] != 0, s, NEG_INF).astype(score_ref.dtype)


def _const_weight_spec(shape):
    """Constant-index (weight) stream: single-buffer it — it is never re-DMA'd across steps."""
    idx = lambda i: (0,) * len(shape)
    try:
        return pl.BlockSpec(shape, idx, pipeline_mode=pl.Buffered(1))
    except TypeError:  # older jax without pipeline_mode on BlockSpec
        return pl.BlockSpec(shape, idx)


def _pick_block_n(n):
    """Multiple-of-8 block, capped at 128, preferring a divisor of n (no padded edge block)
    and >= 2 grid steps (so v7x megacore sharding has work on both TensorCores)."""
    if n <= 16:
        return n
    cap = 128
    start = (min(cap, n // 2) // 8) * 8
    for cand in range(start, 7, -8):
        if n % cand == 0:
            return cand
    return min(cap, max(8, ((n // 2) // 8) * 8))


def _vmem_limit_bytes(block_n, H, K, Kp, act_itemsize):
    """Explicit scoped-VMEM budget from the computed residency (with headroom)."""
    dbl = 2  # batched input/output streams are double-buffered by the pipeline
    pool_b = block_n * K * H * act_itemsize * dbl
    ctx_b = block_n * 2 * H * act_itemsize * dbl
    sk_b = block_n * H * act_itemsize * dbl
    mask_b = block_n * Kp * 4 * dbl
    out_b = block_n * Kp * 4 * dbl
    w_b = (4 * H * H + 2 * H) * act_itemsize  # single-buffered constant streams
    total = pool_b + ctx_b + sk_b + mask_b + out_b + w_b
    # 2x headroom for layout padding / compiler scratch; never below the 32 MiB default.
    return int(min(128 << 20, max(32 << 20, 2 * total)))


def init_params(key, hidden_size, dtype=jnp.bfloat16):
    """nn.Linear-style init (U(+-1/sqrt(fan_in))), stored in the layouts/dtype the kernel
    consumes (bf16 by default -> native MXU path, half the weight HBM/VMEM footprint)."""
    h = hidden_size
    k1, k2, k3, k4, k5 = jax.random.split(key, 5)
    bound_ck = 1.0 / (3.0 * h) ** 0.5
    bound_k = 1.0 / h ** 0.5
    u = lambda k, shape, b: jax.random.uniform(k, shape, jnp.float32, -b, b).astype(dtype)
    return {
        # project_c_k split: [2H,H] block acting on [cx|cy], [H,H] block acting on sk ([in,out]).
        "w_ck_xy": u(k1, (2 * h, h), bound_ck),
        "w_ck_s": u(k2, (h, h), bound_ck),
        "b_ck": u(k3, (1, h), bound_ck),
        # project_k in PyTorch [out, in] layout — exactly what v = con_pro @ W_k needs.
        "w_k": u(k4, (h, h), bound_k),
        "b_k": u(k5, (1, h), bound_k),
    }


def posterior_knowledge_tracker(params,
                                contexts_encoded,
                                shifted_knowledge_use,
                                knowledge_tracking_pool_encoded,
                                knowledge_tracking_pool_mask,
                                tracking_ck_mask,
                                knowledge_tracking_label,
                                mode="train",
                                block_n=None):
    ctx_use = contexts_encoded[1]                              # [N, 2, H]
    pool_enc, pool_use = knowledge_tracking_pool_encoded       # [N, K, T, H], [N, K, H]
    N, K, T, H = pool_enc.shape

    # Cast activation streams to the weight dtype (bf16 by default): halves HBM traffic and
    # keeps every MXU/VPU operand on the native narrow path.  Accumulation is f32 in-kernel.
    wdt = params["w_ck_xy"].dtype
    ctx2 = ctx_use.reshape(N, 2 * H).astype(wdt)               # [N, 2H] (free, contiguous)
    sk = shifted_knowledge_use.astype(wdt)                     # [N, H]
    pool_c = pool_use.astype(wdt)                              # [N, K, H]

    # Lane-dense score width (multiple of 128).
    Kp = ((K + 127) // 128) * 128
    mask_p = jnp.pad(tracking_ck_mask.astype(jnp.int32), ((0, 0), (0, Kp - K)))

    if block_n is None:
        block_n = _pick_block_n(N)
    grid = (pl.cdiv(N, block_n),)

    b2 = lambda i: (i, 0)
    b3 = lambda i: (i, 0, 0)

    in_specs = [
        pl.BlockSpec((block_n, 2 * H), b2),          # ctx2
        pl.BlockSpec((block_n, H), b2),              # sk
        _const_weight_spec((2 * H, H)),              # w_ck_xy
        _const_weight_spec((H, H)),                  # w_ck_s
        _const_weight_spec((1, H)),                  # b_ck
        _const_weight_spec((H, H)),                  # w_k
        _const_weight_spec((1, H)),                  # b_k
        pl.BlockSpec((block_n, K, H), b3),           # pool_use
        pl.BlockSpec((block_n, Kp), b2),             # mask (padded, int32)
    ]
    out_specs = pl.BlockSpec((block_n, Kp), b2)

    vmem_limit = _vmem_limit_bytes(block_n, H, K, Kp, jnp.dtype(wdt).itemsize)

    score_padded = pl.pallas_call(
        _score_kernel,
        out_shape=jax.ShapeDtypeStruct((N, Kp), jnp.float32),
        grid=grid,
        in_specs=in_specs,
        out_specs=out_specs,
        compiler_params=pltpu.CompilerParams(
            dimension_semantics=("parallel",),
            vmem_limit_bytes=vmem_limit,
        ),
    )(ctx2, sk,
      params["w_ck_xy"], params["w_ck_s"], params["b_ck"],
      params["w_k"], params["b_k"],
      pool_c, mask_p)

    knowledge_tracking_score = score_padded[:, :K]             # [N, K]

    if mode == "inference":
        knowledge_tracking_ids = jnp.argmax(knowledge_tracking_score, axis=1).astype(jnp.int32)
    else:  # 'train'
        knowledge_tracking_ids = knowledge_tracking_label

    # Gather of the selected knowledge — pure indexing glue (flatten + offsets), kept in JAX.
    offsets = jnp.arange(N, dtype=jnp.int32) * K + knowledge_tracking_ids
    tracked_knowledge_use = pool_use.reshape(N * K, H)[offsets]                       # [N, H]
    tracked_knowledge_encoded = pool_enc.reshape(N * K, T, H)[offsets]                # [N, T, H]
    tracked_knowledge_mask = knowledge_tracking_pool_mask.reshape(N * K, T)[offsets]  # [N, T]

    return (knowledge_tracking_score, tracked_knowledge_encoded,
            tracked_knowledge_mask, tracked_knowledge_use)


def _reference_score(params, ctx_use, sk, pool_use, tracking_ck_mask):
    """Un-refactored two-projection formula (matches the PyTorch module), f32 math."""
    f32 = jnp.float32
    n = ctx_use.shape[0]
    ctx2 = ctx_use.reshape(n, -1).astype(f32)
    con_pro = (ctx2 @ params["w_ck_xy"].astype(f32)
               + sk.astype(f32) @ params["w_ck_s"].astype(f32)
               + params["b_ck"].astype(f32))
    pool_pro = pool_use.astype(f32) @ params["w_k"].astype(f32).T + params["b_k"].astype(f32)
    score = jnp.einsum("nkh,nh->nk", pool_pro, con_pro)
    return jnp.where(tracking_ck_mask, score, NEG_INF)


if __name__ == "__main__":
    N, K, T, H = 2, 8, 8, 32

    key = jax.random.PRNGKey(0)
    kp, k1, k2, k3, k4, k5, k6 = jax.random.split(key, 7)

    params = init_params(kp, H)                                # bf16 weights

    # Pooled streams pre-cast to bf16 so kernel and reference see identical operands.
    contexts_encoded = (
        jax.random.normal(k1, (N, 2, T, H), jnp.float32),                      # token-level (unused)
        jax.random.normal(k2, (N, 2, H), jnp.float32).astype(jnp.bfloat16),    # pooled context reps
    )
    shifted_knowledge_use = jax.random.normal(k3, (N, H), jnp.float32).astype(jnp.bfloat16)
    knowledge_tracking_pool_encoded = (
        jax.random.normal(k4, (N, K, T, H), jnp.float32),                      # token-level
        jax.random.normal(k5, (N, K, H), jnp.float32).astype(jnp.bfloat16),    # pooled
    )
    knowledge_tracking_pool_mask = jax.random.uniform(k6, (N, K, T)) > 0.3
    tracking_ck_mask = jnp.concatenate(
        [jnp.ones((N, 1), bool),                               # guarantee >= 1 valid candidate
         jax.random.uniform(jax.random.PRNGKey(42), (N, K - 1)) > 0.3], axis=1)
    knowledge_tracking_label = jnp.array([1, 3], dtype=jnp.int32)

    outs = posterior_knowledge_tracker(
        params, contexts_encoded, shifted_knowledge_use,
        knowledge_tracking_pool_encoded, knowledge_tracking_pool_mask,
        tracking_ck_mask, knowledge_tracking_label, mode="train")
    outs = jax.block_until_ready(outs)

    score, trk_enc, trk_mask, trk_use = outs
    assert score.shape == (N, K)
    assert trk_enc.shape == (N, T, H)
    assert trk_mask.shape == (N, T)
    assert trk_use.shape == (N, H)

    ref_score = _reference_score(params, contexts_encoded[1], shifted_knowledge_use,
                                 knowledge_tracking_pool_encoded[1], tracking_ck_mask)
    assert jnp.allclose(score, ref_score, atol=2e-2, rtol=2e-2), "score mismatch vs reference"

    # inference mode path (argmax over masked scores) also exercises cleanly
    _ = jax.block_until_ready(posterior_knowledge_tracker(
        params, contexts_encoded, shifted_knowledge_use,
        knowledge_tracking_pool_encoded, knowledge_tracking_pool_mask,
        tracking_ck_mask, knowledge_tracking_label, mode="inference"))

    # Non-divisible batch: N=10 with block_n=8 -> 2-step grid with a padded edge block.
    N2 = 10
    kk = jax.random.split(jax.random.PRNGKey(7), 6)
    ctx_use2 = jax.random.normal(kk[0], (N2, 2, H), jnp.float32).astype(jnp.bfloat16)
    sk2 = jax.random.normal(kk[1], (N2, H), jnp.float32).astype(jnp.bfloat16)
    pool_enc2 = jax.random.normal(kk[2], (N2, K, T, H), jnp.float32)
    pool_use2 = jax.random.normal(kk[3], (N2, K, H), jnp.float32).astype(jnp.bfloat16)
    pool_mask2 = jax.random.uniform(kk[4], (N2, K, T)) > 0.3
    ck_mask2 = jnp.concatenate(
        [jnp.ones((N2, 1), bool),
         jax.random.uniform(kk[5], (N2, K - 1)) > 0.3], axis=1)
    label2 = jnp.zeros((N2,), jnp.int32)
    score2 = posterior_knowledge_tracker(
        params, (jnp.zeros((N2, 2, T, H), jnp.float32), ctx_use2), sk2,
        (pool_enc2, pool_use2), pool_mask2, ck_mask2, label2,
        mode="train", block_n=8)[0]
    score2 = jax.block_until_ready(score2)
    ref2 = _reference_score(params, ctx_use2, sk2, pool_use2, ck_mask2)
    assert jnp.allclose(score2, ref2, atol=2e-2, rtol=2e-2), "edge-block score mismatch"

    print("KERNEL_OK")
</pallas_src>

<mosaic_0001>
module attributes {stable_mosaic.version = 11 : i64} {
  func.func @_score_kernel(%arg0: i32, %arg1: memref<2x64xbf16, #tpu.memory_space<vmem>>, %arg2: memref<2x32xbf16, #tpu.memory_space<vmem>>, %arg3: memref<64x32xbf16, #tpu.memory_space<vmem>>, %arg4: memref<32x32xbf16, #tpu.memory_space<vmem>>, %arg5: memref<1x32xbf16, #tpu.memory_space<vmem>>, %arg6: memref<32x32xbf16, #tpu.memory_space<vmem>>, %arg7: memref<1x32xbf16, #tpu.memory_space<vmem>>, %arg8: memref<2x8x32xbf16, #tpu.memory_space<vmem>>, %arg9: memref<2x128xi32, #tpu.memory_space<vmem>>, %arg10: memref<2x128xf32, #tpu.memory_space<vmem>>) attributes {dimension_semantics = [#tpu.dimension_semantics<parallel>], iteration_bounds = array<i64: 1>, scalar_prefetch = 0 : i64, scratch_operands = 0 : i64, tpu.core_type = #tpu.core_type<tc>, window_params = [{transform_indices = @transform_0, window_bounds = array<i64: 2, 64>}, {transform_indices = @transform_1, window_bounds = array<i64: 2, 32>}, {pipeline_mode = #tpu.pipeline_mode<synchronous>, transform_indices = @transform_2, window_bounds = array<i64: 64, 32>}, {pipeline_mode = #tpu.pipeline_mode<synchronous>, transform_indices = @transform_3, window_bounds = array<i64: 32, 32>}, {pipeline_mode = #tpu.pipeline_mode<synchronous>, transform_indices = @transform_4, window_bounds = array<i64: 1, 32>}, {pipeline_mode = #tpu.pipeline_mode<synchronous>, transform_indices = @transform_5, window_bounds = array<i64: 32, 32>}, {pipeline_mode = #tpu.pipeline_mode<synchronous>, transform_indices = @transform_6, window_bounds = array<i64: 1, 32>}, {transform_indices = @transform_7, window_bounds = array<i64: 2, 8, 32>}, {transform_indices = @transform_8, window_bounds = array<i64: 2, 128>}, {transform_indices = @transform_9, window_bounds = array<i64: 2, 128>}]} {
    %c0 = arith.constant 0 : index
    %c0_0 = arith.constant 0 : index
    %0 = vector.load %arg1[%c0, %c0_0] : memref<2x64xbf16, #tpu.memory_space<vmem>>, vector<2x64xbf16>
    %c0_1 = arith.constant 0 : index
    %c0_2 = arith.constant 0 : index
    %1 = vector.load %arg3[%c0_1, %c0_2] : memref<64x32xbf16, #tpu.memory_space<vmem>>, vector<64x32xbf16>
    %cst = arith.constant dense<0.000000e+00> : vector<2x32xf32>
    %2 = tpu.matmul %0, %1, %cst {dimension_numbers = #tpu.dot_dimension_numbers<[1], [0], [0], [1], [0, 0, 1, 1], [], []>} : vector<2x64xbf16>, vector<64x32xbf16>, vector<2x32xf32> -> vector<2x32xf32>
    %c0_3 = arith.constant 0 : index
    %c0_4 = arith.constant 0 : index
    %3 = vector.load %arg2[%c0_3, %c0_4] : memref<2x32xbf16, #tpu.memory_space<vmem>>, vector<2x32xbf16>
    %c0_5 = arith.constant 0 : index
    %c0_6 = arith.constant 0 : index
    %4 = vector.load %arg4[%c0_5, %c0_6] : memref<32x32xbf16, #tpu.memory_space<vmem>>, vector<32x32xbf16>
    %cst_7 = arith.constant dense<0.000000e+00> : vector<2x32xf32>
    %5 = tpu.matmul %3, %4, %cst_7 {dimension_numbers = #tpu.dot_dimension_numbers<[1], [0], [0], [1], [0, 0, 1, 1], [], []>} : vector<2x32xbf16>, vector<32x32xbf16>, vector<2x32xf32> -> vector<2x32xf32>
    %6 = arith.addf %2, %5 : vector<2x32xf32>
    %c0_8 = arith.constant 0 : index
    %c0_9 = arith.constant 0 : index
    %7 = vector.load %arg5[%c0_8, %c0_9] : memref<1x32xbf16, #tpu.memory_space<vmem>>, vector<1x32xbf16>
    %8 = arith.extf %7 : vector<1x32xbf16> to vector<1x32xf32>
    %9 = vector.broadcast %8 : vector<1x32xf32> to vector<2x32xf32>
    %10 = arith.addf %6, %9 : vector<2x32xf32>
    %11 = arith.truncf %10 : vector<2x32xf32> to vector<2x32xbf16>
    %c0_10 = arith.constant 0 : index
    %c0_11 = arith.constant 0 : index
    %12 = vector.load %arg6[%c0_10, %c0_11] : memref<32x32xbf16, #tpu.memory_space<vmem>>, vector<32x32xbf16>
    %cst_12 = arith.constant dense<0.000000e+00> : vector<2x32xf32>
    %13 = tpu.matmul %11, %12, %cst_12 {dimension_numbers = #tpu.dot_dimension_numbers<[1], [0], [0], [1], [0, 0, 1, 1], [], []>} : vector<2x32xbf16>, vector<32x32xbf16>, vector<2x32xf32> -> vector<2x32xf32>
    %c0_13 = arith.constant 0 : index
    %c0_14 = arith.constant 0 : index
    %14 = vector.load %arg7[%c0_13, %c0_14] : memref<1x32xbf16, #tpu.memory_space<vmem>>, vector<1x32xbf16>
    %15 = arith.extf %14 : vector<1x32xbf16> to vector<1x32xf32>
    %16 = vector.broadcast %15 : vector<1x32xf32> to vector<2x32xf32>
    %17 = arith.mulf %10, %16 : vector<2x32xf32>
    %cst_15 = arith.constant dense<0.000000e+00> : vector<2xf32>
    %18 = vector.multi_reduction <add>, %17, %cst_15 [1] : vector<2x32xf32> to vector<2xf32>
    %19 = vector.shape_cast %18 : vector<2xf32> to vector<2x1xf32>
    %c0_16 = arith.constant 0 : index
    %c0_17 = arith.constant 0 : index
    %c0_18 = arith.constant 0 : index
    %20 = vector.load %arg8[%c0_16, %c0_17, %c0_18] : memref<2x8x32xbf16, #tpu.memory_space<vmem>>, vector<2x8x32xbf16>
    %21 = arith.truncf %13 : vector<2x32xf32> to vector<2x32xbf16>
    %22 = vector.shape_cast %21 : vector<2x32xbf16> to vector<2x1x32xbf16>
    %23 = vector.broadcast %22 : vector<2x1x32xbf16> to vector<2x8x32xbf16>
    %24 = arith.mulf %20, %23 : vector<2x8x32xbf16>
    %25 = arith.extf %24 : vector<2x8x32xbf16> to vector<2x8x32xf32>
    %cst_19 = arith.constant dense<0.000000e+00> : vector<2x8xf32>
    %26 = vector.multi_reduction <add>, %25, %cst_19 [2] : vector<2x8x32xf32> to vector<2x8xf32>
    %cst_20 = arith.constant 0.000000e+00 : f32
    %27 = vector.broadcast %cst_20 : f32 to vector<2x120xf32>
    %28 = tpu.concatenate %26, %27 in 1 : vector<2x8xf32>, vector<2x120xf32> -> vector<2x128xf32>
    %29 = vector.broadcast %19 : vector<2x1xf32> to vector<2x128xf32>
    %30 = arith.addf %28, %29 : vector<2x128xf32>
    %c0_21 = arith.constant 0 : index
    %c0_22 = arith.constant 0 : index
    %31 = vector.load %arg9[%c0_21, %c0_22] : memref<2x128xi32, #tpu.memory_space<vmem>>, vector<2x128xi32>
    %c0_i32 = arith.constant 0 : i32
    %32 = vector.broadcast %c0_i32 : i32 to vector<2x128xi32>
    %33 = arith.cmpi ne, %31, %32 : vector<2x128xi32>
    %cst_23 = arith.constant -1.000000e+20 : f32
    %34 = vector.broadcast %cst_23 : f32 to vector<2x128xf32>
    %35 = arith.select %33, %30, %34 : vector<2x128xi1>, vector<2x128xf32>
    %c0_24 = arith.constant 0 : index
    %c0_25 = arith.constant 0 : index
    %36 = vector.load %arg10[%c0_24, %c0_25] : memref<2x128xf32, #tpu.memory_space<vmem>>, vector<2x128xf32>
    tpu.vector_store %arg10[%c0_24, %c0_25], %35 {strides = array<i32>} : memref<2x128xf32, #tpu.memory_space<vmem>>, vector<2x128xf32>,
    return
  }
  func.func @transform_0(%arg0: i32) -> (i32, i32) {
    %c0_i32 = arith.constant 0 : i32
    %c0_i32_0 = arith.constant 0 : i32
    return %arg0, %c0_i32 : i32, i32
  }
  func.func @transform_1(%arg0: i32) -> (i32, i32) {
    %c0_i32 = arith.constant 0 : i32
    %c0_i32_0 = arith.constant 0 : i32
    return %arg0, %c0_i32 : i32, i32
  }
  func.func @transform_2(%arg0: i32) -> (i32, i32) {
    %c0_i32 = arith.constant 0 : i32
    %c0_i32_0 = arith.constant 0 : i32
    %c0_i32_1 = arith.constant 0 : i32
    return %c0_i32, %c0_i32_0 : i32, i32
  }
  func.func @transform_3(%arg0: i32) -> (i32, i32) {
    %c0_i32 = arith.constant 0 : i32
    %c0_i32_0 = arith.constant 0 : i32
    %c0_i32_1 = arith.constant 0 : i32
    return %c0_i32, %c0_i32_0 : i32, i32
  }
  func.func @transform_4(%arg0: i32) -> (i32, i32) {
    %c0_i32 = arith.constant 0 : i32
    %c0_i32_0 = arith.constant 0 : i32
    %c0_i32_1 = arith.constant 0 : i32
    return %c0_i32, %c0_i32_0 : i32, i32
  }
  func.func @transform_5(%arg0: i32) -> (i32, i32) {
    %c0_i32 = arith.constant 0 : i32
    %c0_i32_0 = arith.constant 0 : i32
    %c0_i32_1 = arith.constant 0 : i32
    return %c0_i32, %c0_i32_0 : i32, i32
  }
  func.func @transform_6(%arg0: i32) -> (i32, i32) {
    %c0_i32 = arith.constant 0 : i32
    %c0_i32_0 = arith.constant 0 : i32
    %c0_i32_1 = arith.constant 0 : i32
    return %c0_i32, %c0_i32_0 : i32, i32
  }
  func.func @transform_7(%arg0: i32) -> (i32, i32, i32) {
    %c0_i32 = arith.constant 0 : i32
    %c0_i32_0 = arith.constant 0 : i32
    %c0_i32_1 = arith.constant 0 : i32
    return %arg0, %c0_i32, %c0_i32_0 : i32, i32, i32
  }
  func.func @transform_8(%arg0: i32) -> (i32, i32) {
    %c0_i32 = arith.constant 0 : i32
    %c0_i32_0 = arith.constant 0 : i32
    return %arg0, %c0_i32 : i32, i32
  }
  func.func @transform_9(%arg0: i32) -> (i32, i32) {
    %c0_i32 = arith.constant 0 : i32
    %c0_i32_0 = arith.constant 0 : i32
    return %arg0, %c0_i32 : i32, i32
  }
}

</mosaic_0001>

<llo_original>
// kernel: tpu_custom_call.1
$region0: #{tpu_custom_call.1}
  #allocation0 [shape = 'u32[]', space=smem, size = 0x4, offset = 0x4, fixed_abs, tag = 'smem constant byte address 0x4 - core index']
  #allocation1 [shape = 'u32[144,128]{1,0:T(1,128)}', space=vmem, size = 0x12000, scoped, tag = 'internal scratch']
  %s0 = inlined_call_operand.vmem [shape: bf16[2,64], index: 0, kind: input, shape index: {}]
  %s1 = inlined_call_operand.vmem [shape: bf16[2,32], index: 1, kind: input, shape index: {}]
  %s2 = inlined_call_operand.vmem [shape: bf16[64,32], index: 2, kind: input, shape index: {}]
  %s3 = inlined_call_operand.vmem [shape: bf16[32,32], index: 3, kind: input, shape index: {}]
  %s4 = inlined_call_operand.vmem [shape: bf16[1,32], index: 4, kind: input, shape index: {}]
  %s5 = inlined_call_operand.vmem [shape: bf16[32,32], index: 5, kind: input, shape index: {}]
  %s6 = inlined_call_operand.vmem [shape: bf16[1,32], index: 6, kind: input, shape index: {}]
  %s7 = inlined_call_operand.vmem [shape: bf16[2,8,32], index: 7, kind: input, shape index: {}]
  %s8 = inlined_call_operand.vmem [shape: s32[2,128], index: 8, kind: input, shape index: {}]
  %s9 = inlined_call_operand.hbm [shape: f32[2,128], index: 9, kind: output, shape index: {}]
  %s10 = sld [smem:[#allocation0]]
  $region46: #{tpu_custom_call.1} parent=0
    _
  %s12 = ssub.s32 1, %s10
  %s13 = scalar_select 0, %s12, %s10
  $region1: #{tpu_custom_call.1} parent=0
    #allocation2 [shape = 'u8[1024]{0}', space=vmem, size = 0x400, scoped, tag = 'output window, operand 0, single buffered']
    #allocation3 [shape = 's32[1]{0}', space=sflag, size = 0x4, scoped, tag = 'scoped memory for tpu_custom_call.1']
    %14 = vsyncpa [#allocation3], 0
    // Predicated region
    $region2: #{tpu_custom_call.1} parent=1 // pred_check
      _
    $region3: #{tpu_custom_call.1} parent=1 // pred_check_branch
      %16 = sbr.rel (0) target = $region5
    $region4: #{tpu_custom_call.1} parent=1 // pred_region
      _
    $region5: #{tpu_custom_call.1} parent=1 // pred_fallthru
      _
    // Predicated region
    $region6: #{tpu_custom_call.1} parent=1 // pred_check
      _
    $region7: #{tpu_custom_call.1} parent=1 // pred_check_branch
      %18 = sbr.rel (0) target = $region9
    $region8: #{tpu_custom_call.1} parent=1 // pred_region
      _
    $region9: #{tpu_custom_call.1} parent=1 // pred_fallthru
      _
    // Predicated region
    $region10: #{tpu_custom_call.1} parent=1 // pred_check
      _
    $region11: #{tpu_custom_call.1} parent=1 // pred_check_branch
      %20 = sbr.rel (0) target = $region13
    $region12: #{tpu_custom_call.1} parent=1 // pred_region
      _
    $region13: #{tpu_custom_call.1} parent=1 // pred_fallthru
      _
    // Predicated region
    $region14: #{tpu_custom_call.1} parent=1 // pred_check
      _
    $region15: #{tpu_custom_call.1} parent=1 // pred_check_branch
      %22 = sbr.rel (0) target = $region17
    $region16: #{tpu_custom_call.1} parent=1 // pred_region
      _
    $region17: #{tpu_custom_call.1} parent=1 // pred_fallthru
      _
    // Predicated region
    $region18: #{tpu_custom_call.1} parent=1 // pred_check
      _
    $region19: #{tpu_custom_call.1} parent=1 // pred_check_branch
      %24 = sbr.rel (0) target = $region21
    $region20: #{tpu_custom_call.1} parent=1 // pred_region
      _
    $region21: #{tpu_custom_call.1} parent=1 // pred_fallthru
      _
    // Predicated region
    $region22: #{tpu_custom_call.1} parent=1 // pred_check
      _
    $region23: #{tpu_custom_call.1} parent=1 // pred_check_branch
      %26 = sbr.rel (0) target = $region25
    $region24: #{tpu_custom_call.1} parent=1 // pred_region
      _
    $region25: #{tpu_custom_call.1} parent=1 // pred_fallthru
      _
    // Predicated region
    $region26: #{tpu_custom_call.1} parent=1 // pred_check
      _
    $region27: #{tpu_custom_call.1} parent=1 // pred_check_branch
      %28 = sbr.rel (0) target = $region29
    $region28: #{tpu_custom_call.1} parent=1 // pred_region
      _
    $region29: #{tpu_custom_call.1} parent=1 // pred_fallthru
      _
    // Predicated region
    $region30: #{tpu_custom_call.1} parent=1 // pred_check
      _
    $region31: #{tpu_custom_call.1} parent=1 // pred_check_branch
      %30 = sbr.rel (0) target = $region33
    $region32: #{tpu_custom_call.1} parent=1 // pred_region
      _
    $region33: #{tpu_custom_call.1} parent=1 // pred_fallthru
      _
    // Predicated region
    $region34: #{tpu_custom_call.1} parent=1 // pred_check
      _
    $region35: #{tpu_custom_call.1} parent=1 // pred_check_branch
      %32 = sbr.rel (0) target = $region37
    $region36: #{tpu_custom_call.1} parent=1 // pred_region
      _
    $region37: #{tpu_custom_call.1} parent=1 // pred_fallthru
      _
    %v34 = vld [vmem:[%s0] sm:$0x1]
    %v35 = vld [vmem:[%s2] sm:$0xf]
    %v36 = vld [vmem:[%s2 + $0x4] sm:$0xf]
    %v37 = vld [vmem:[%s2 + $0x8] sm:$0xf]
    %v38 = vld [vmem:[%s2 + $0xc] sm:$0xf]
    %v39 = vld [vmem:[%s2 + $0x10] sm:$0xf]
    %v40 = vld [vmem:[%s2 + $0x14] sm:$0xf]
    %v41 = vld [vmem:[%s2 + $0x18] sm:$0xf]
    %v42 = vld [vmem:[%s2 + $0x1c] sm:$0xf]
    %v43 = vld [vmem:[%s1] sm:$0x1]
    %v44 = vld [vmem:[%s3] sm:$0xf]
    %v45 = vld [vmem:[%s3 + $0x4] sm:$0xf]
    %v46 = vld [vmem:[%s3 + $0x8] sm:$0xf]
    %v47 = vld [vmem:[%s3 + $0xc] sm:$0xf]
    %v52 = vunpack.c.l.b16 %v44
    %v53 = vunpack.c.l.b16 %v45
    %v54 = vunpack.c.l.b16 %v46
    %v55 = vunpack.c.l.b16 %v47
    %v56 = vpack.c.b16 %v53, %v52
    %v57 = vpack.c.b16 %v55, %v54
    %vm60 = vcmask 261120
    %v62 = vsel %vm60, %v43, 0
    %64 = vmatprep.subr.bf16.mxu0 0
    %65 = vmatpush1.bf16.msra.mxu0 %v56
    %66 = vmatprep.subr.bf16.mxu0 0
    %67 = vmatpush1.bf16.msra.mxu0 %v57
    %68 = vmatprep.subr.bf16.mxu0 0
    %69 = vmatpush1.bf16.msra.mxu0 0
    %70 = vmatprep.subr.bf16.mxu0 0
    %71 = vmatpush1.bf16.msra.mxu0 0
    %72 = vmatprep.subr.bf16.mxu0 0
    %73 = vmatpush1.bf16.msra.mxu0 0
    %74 = vmatprep.subr.bf16.mxu0 0
    %75 = vmatpush1.bf16.msra.mxu0 0
    %76 = vmatprep.subr.bf16.mxu0 0
    %77 = vmatpush1.bf16.msra.mxu0 0
    %78 = vmatprep.subr.bf16.mxu0 0
    %79 = vmatpush1.bf16.msra.mxu0 0
    %80 = vmatprep.subr.bf16.mxu0 0
    %81 = vmatpush1.bf16.msra.mxu0 0
    %82 = vmatprep.subr.bf16.mxu0 0
    %83 = vmatpush1.bf16.msra.mxu0 0
    %84 = vmatprep.subr.bf16.mxu0 0
    %85 = vmatpush1.bf16.msra.mxu0 0
    %86 = vmatprep.subr.bf16.mxu0 0
    %87 = vmatpush1.bf16.msra.mxu0 0
    %88 = vmatprep.subr.bf16.mxu0 0
    %89 = vmatpush1.bf16.msra.mxu0 0
    %90 = vmatprep.subr.bf16.mxu0 0
    %91 = vmatpush1.bf16.msra.mxu0 0
    %92 = vmatprep.subr.bf16.mxu0 0
    %93 = vmatpush1.bf16.msra.mxu0 0
    %94 = vmatprep.subr.bf16.mxu0 0
    %95 = vmatpush1.bf16.msra.mxu0 0
    %96 = vmatprep.mubr.bf16.mxu0 0
    %97 = vmatmul.mubr.bf16.gmra.mrb[0].mxu0 %v62
    %v98 = vpop.f32.mrb[0].mxu0
    %v99 = vadd.f32 0.0, %v98
    %v100 = vpop.f32.mrb[0].mxu0
    %v101 = vpop.f32.mrb[0].mxu0
    %v102 = vpop.f32.mrb[0].mxu0
    %103 = vdwg.mxu0
    %v112 = vunpack.c.l.b16 %v35
    %v113 = vunpack.c.l.b16 %v36
    %v114 = vunpack.c.l.b16 %v37
    %v115 = vunpack.c.l.b16 %v38
    %v116 = vunpack.c.l.b16 %v39
    %v117 = vunpack.c.l.b16 %v40
    %v118 = vunpack.c.l.b16 %v41
    %v119 = vunpack.c.l.b16 %v42
    %v120 = vpack.c.b16 %v113, %v112
    %v121 = vpack.c.b16 %v115, %v114
    %v122 = vpack.c.b16 %v117, %v116
    %v123 = vpack.c.b16 %v119, %v118
    %vm128 = vcmask 523264
    %v130 = vsel %vm128, %v34, 0
    %132 = vmatprep.subr.bf16.mxu0 0
    %133 = vmatpush1.bf16.msra.mxu0 %v120
    %134 = vmatprep.subr.bf16.mxu0 0
    %135 = vmatpush1.bf16.msra.mxu0 %v121
    %136 = vmatprep.subr.bf16.mxu0 0
    %137 = vmatpush1.bf16.msra.mxu0 %v122
    %138 = vmatprep.subr.bf16.mxu0 0
    %139 = vmatpush1.bf16.msra.mxu0 %v123
    %140 = vmatprep.subr.bf16.mxu0 0
    %141 = vmatpush1.bf16.msra.mxu0 0
    %142 = vmatprep.subr.bf16.mxu0 0
    %143 = vmatpush1.bf16.msra.mxu0 0
    %144 = vmatprep.subr.bf16.mxu0 0
    %145 = vmatpush1.bf16.msra.mxu0 0
    %146 = vmatprep.subr.bf16.mxu0 0
    %147 = vmatpush1.bf16.msra.mxu0 0
    %148 = vmatprep.subr.bf16.mxu0 0
    %149 = vmatpush1.bf16.msra.mxu0 0
    %150 = vmatprep.subr.bf16.mxu0 0
    %151 = vmatpush1.bf16.msra.mxu0 0
    %152 = vmatprep.subr.bf16.mxu0 0
    %153 = vmatpush1.bf16.msra.mxu0 0
    %154 = vmatprep.subr.bf16.mxu0 0
    %155 = vmatpush1.bf16.msra.mxu0 0
    %156 = vmatprep.subr.bf16.mxu0 0
    %157 = vmatpush1.bf16.msra.mxu0 0
    %158 = vmatprep.subr.bf16.mxu0 0
    %159 = vmatpush1.bf16.msra.mxu0 0
    %160 = vmatprep.subr.bf16.mxu0 0
    %161 = vmatpush1.bf16.msra.mxu0 0
    %162 = vmatprep.subr.bf16.mxu0 0
    %163 = vmatpush1.bf16.msra.mxu0 0
    %164 = vmatprep.mubr.bf16.mxu0 0
    %165 = vmatmul.mubr.bf16.gmra.mrb[0].mxu0 %v130
    %v166 = vpop.f32.mrb[0].mxu0
    %v167 = vadd.f32 %v99, %v166
    %v168 = vpop.f32.mrb[0].mxu0
    %v169 = vpop.f32.mrb[0].mxu0
    %v170 = vpop.f32.mrb[0].mxu0
    %171 = vdwg.mxu0
    %v172 = vld [vmem:[%s4] sm:$0x1]
    %v173 = vunpack.c.l.bf16 %v172
    %v174 = vlaneseq
    %v175 = vshrl.u32 %v174, 7
    %v176 = vsub.s32 0, %v175
    %v177 = vrot.slane %v173, %v176
    %v178 = vadd.f32 %v167, %v177
    %v179 = vpack.c.bf16 %v178, %v178
    %v180 = vld [vmem:[%s5] sm:$0xf]
    %v181 = vld [vmem:[%s5 + $0x4] sm:$0xf]
    %v182 = vld [vmem:[%s5 + $0x8] sm:$0xf]
    %v183 = vld [vmem:[%s5 + $0xc] sm:$0xf]
    %v188 = vunpack.c.l.b16 %v180
    %v189 = vunpack.c.l.b16 %v181
    %v190 = vunpack.c.l.b16 %v182
    %v191 = vunpack.c.l.b16 %v183
    %v192 = vpack.c.b16 %v189, %v188
    %v193 = vpack.c.b16 %v191, %v190
    %v197 = vsel %vm60, %v179, 0
    %199 = vmatprep.subr.bf16.mxu0 0
    %200 = vmatpush1.bf16.msra.mxu0 %v192
    %201 = vmatprep.subr.bf16.mxu0 0
    %202 = vmatpush1.bf16.msra.mxu0 %v193
    %203 = vmatprep.subr.bf16.mxu0 0
    %204 = vmatpush1.bf16.msra.mxu0 0
    %205 = vmatprep.subr.bf16.mxu0 0
    %206 = vmatpush1.bf16.msra.mxu0 0
    %207 = vmatprep.subr.bf16.mxu0 0
    %208 = vmatpush1.bf16.msra.mxu0 0
    %209 = vmatprep.subr.bf16.mxu0 0
    %210 = vmatpush1.bf16.msra.mxu0 0
    %211 = vmatprep.subr.bf16.mxu0 0
    %212 = vmatpush1.bf16.msra.mxu0 0
    %213 = vmatprep.subr.bf16.mxu0 0
    %214 = vmatpush1.bf16.msra.mxu0 0
    %215 = vmatprep.subr.bf16.mxu0 0
    %216 = vmatpush1.bf16.msra.mxu0 0
    %217 = vmatprep.subr.bf16.mxu0 0
    %218 = vmatpush1.bf16.msra.mxu0 0
    %219 = vmatprep.subr.bf16.mxu0 0
    %220 = vmatpush1.bf16.msra.mxu0 0
    %221 = vmatprep.subr.bf16.mxu0 0
    %222 = vmatpush1.bf16.msra.mxu0 0
    %223 = vmatprep.subr.bf16.mxu0 0
    %224 = vmatpush1.bf16.msra.mxu0 0
    %225 = vmatprep.subr.bf16.mxu0 0
    %226 = vmatpush1.bf16.msra.mxu0 0
    %227 = vmatprep.subr.bf16.mxu0 0
    %228 = vmatpush1.bf16.msra.mxu0 0
    %229 = vmatprep.subr.bf16.mxu0 0
    %230 = vmatpush1.bf16.msra.mxu0 0
    %231 = vmatprep.mubr.bf16.mxu0 0
    %232 = vmatmul.mubr.bf16.gmra.mrb[0].mxu0 %v197
    %v233 = vpop.f32.mrb[0].mxu0
    %v234 = vadd.f32 0.0, %v233
    %v235 = vpop.f32.mrb[0].mxu0
    %v236 = vpop.f32.mrb[0].mxu0
    %v237 = vpop.f32.mrb[0].mxu0
    %238 = vdwg.mxu0
    %v239 = vld [vmem:[%s6] sm:$0x1]
    %v240 = vunpack.c.l.bf16 %v239
    %v241 = vlaneseq
    %v242 = vshrl.u32 %v241, 7
    %v243 = vsub.s32 0, %v242
    %v244 = vrot.slane %v240, %v243
    %v245 = vmul.f32 %v178, %v244
    %vm246 = vcmask 254976
    %v247 = vsel %vm246, %v245, 0.0
    %248 = vadd.xlane.f32.xlu0 %v247
    %v249 = vpop.xlane.xlu0 %248
    %v250 = vld [vmem:[%s7] sm:$0xf]
    %v251 = vld [vmem:[%s7 + $0x4] sm:$0xf]
    %v252 = vpack.c.bf16 %v234, %v234
    %v255 = vunpack.c.l.s4 1966171168
    %v256 = vunpack.c.0.s8 %v255
    %v257 = vlaneseq
    %v258 = vshrl.u32 %v257, 7
    %v259 = vsub.s32 %v256, %v258
    %v260 = vrot.slane %v252, %v259
    %v262 = vunpack.c.l.s4 1966171168
    %v263 = vunpack.c.0.s8 %v262
    %v264 = vlaneseq
    %v265 = vshrl.u32 %v264, 7
    %v266 = vsub.s32 %v263, %v265
    %v267 = vrot.slane %v260, %v266
    %v268 = vunpack.i.l.s16 %v267
    %v269 = vunpack.i.h.s16 %v267
    %v270 = vpack.i.b16 %v268, %v268
    %v271 = vpack.i.b16 %v269, %v269
    %v272 = vlaneseq
    %v273 = vshrl.u32 %v272, 7
    %v274 = vsub.s32 0, %v273
    %v275 = vrot.slane %v270, %v274
    %v276 = vlaneseq
    %v277 = vshrl.u32 %v276, 7
    %v278 = vsub.s32 0, %v277
    %v279 = vrot.slane %v271, %v278
    %v281 = vpack.i.b16 %v275, %v275
    %v283 = vlaneseq
    %v284 = vshrl.u32 %v283, 7
    %v285 = vsub.s32 0, %v284
    %v286 = vrot.slane %v281, %v285
    %v288 = vpack.i.b16 %v279, %v279
    %v290 = vlaneseq
    %v291 = vshrl.u32 %v290, 7
    %v292 = vsub.s32 0, %v291
    %v293 = vrot.slane %v288, %v292
    %v294 = vmul.bf16 %v250, %v286
    %v295 = vmul.bf16 %v251, %v293
    %v296 = vunpack.c.l.bf16 %v294
    %v297 = vunpack.c.l.bf16 %v295
    %v298 = vsel %vm60, %v296, 0.0
    %299 = vadd.xlane.f32.xlu0 %v298
    %v300 = vpop.xlane.xlu0 %299
    %v301 = vsel %vm60, %v297, 0.0
    %302 = vadd.xlane.f32.xlu0 %v301
    %v303 = vpop.xlane.xlu0 %302
    %v306 = vlaneseq
    %v307 = vand.u32 %v306, 127
    %v308 = vlaneseq
    %v309 = vshrl.u32 %v308, 7
    %v310 = vsub.s32 %v307, %v309
    %v311 = vrot.slane %v300, %v310
    %v312 = vlaneseq
    %v313 = vshrl.u32 %v312, 7
    %v314 = vsub.s32 %v307, %v313
    %v315 = vrot.slane %v303, %v314
    %vm316 = vcmask 1041409
    %v317 = vsel %vm316, %v315, %v311
    %vm319 = vcmask 64512
    %v320 = vsel %vm319, %v317, 0.0
    %v321 = vadd.f32 %v320, %v249
    %v322 = vld [vmem:[%s8] sm:$0x3]
    %vm323 = vcmp.ne.s32.totalorder %v322, 0
    %v324 = vsel %vm323, %v321, -1e+20
    %325 = vst [vmem:[#allocation2] sm:$0x3] %v324
    // Predicated region
    $region38: #{tpu_custom_call.1} parent=1 // pred_check
      _
    $region39: #{tpu_custom_call.1} parent=1 // pred_check_branch
      %327 = sbr.rel (0) target = $region41
    $region40: #{tpu_custom_call.1} parent=1 // pred_region
      %s329 = ssub.s32 32, 32
      %330 = vsyncadd [#allocation3], %s329
      %s332 = sshll.u32 [#allocation2], 4
      %s333 = int_to_ptr.vmem [resolvable:$true] %s332
      %335 = dma.vmem_to_hbm [thread:$0]  %s333, 32, %s9, [#allocation3]
    $region41: #{tpu_custom_call.1} parent=1 // pred_fallthru
      _
    // Predicated region
    $region42: #{tpu_custom_call.1} parent=1 // pred_check
      _
    $region43: #{tpu_custom_call.1} parent=1 // pred_check_branch
      %337 = sbr.rel (0) target = $region45
    $region44: #{tpu_custom_call.1} parent=1 // pred_region
      %338 = dma.done [#allocation3], 32
    $region45: #{tpu_custom_call.1} parent=1 // pred_fallthru
      _
    %339 = vsyncpa [#allocation3], 1

</llo_original>
